<compile_context>
chip_gen: v7x
topology: tpu7x:2x2x1
jax: 0.10.0
libtpu: 0.0.40
codegen_flags: <defaults>
</compile_context>

<pallas_src>
import functools

import jax
import jax.numpy as jnp
from jax import lax
from jax.experimental import pallas as pl
from jax.experimental.pallas import tpu as pltpu


def _round_up(a: int, b: int) -> int:
    return (a + b - 1) // b * b


def _cdiv(a: int, b: int) -> int:
    return (a + b - 1) // b


def _cosine_sim_kernel(x_ref, y_ref, xs_ref, ys_ref, o_ref):
    # MXU: A @ B^T, contracting the last dims directly (native NT form, no transposed
    # copy of y, f32 accumulation).
    dots = lax.dot_general(
        x_ref[...], y_ref[...],
        dimension_numbers=(((1,), (1,)), ((), ())),
        preferred_element_type=jnp.float32,
    )                                                   # [TM, TN] f32
    # Epilogue: two VPU multiplies per element. xs already folds in 1/temp.
    o_ref[...] = (dots * xs_ref[...] * ys_ref[...]).astype(o_ref.dtype)


def _dot_sim_kernel(x_ref, y_ref, o_ref, *, inv_temp):
    dots = lax.dot_general(
        x_ref[...], y_ref[...],
        dimension_numbers=(((1,), (1,)), ((), ())),
        preferred_element_type=jnp.float32,
    )
    o_ref[...] = (dots * inv_temp).astype(o_ref.dtype)


# Conservative decision budget: leaves headroom inside v7x's 64 MiB physical VMEM,
# trivially fits v5e/v6e's 128 MiB.
_VMEM_BUDGET = 40 * 1024 * 1024


def _pick_tile(size: int, block: int, align: int, min_blocks: int = 1) -> int:
    """Balanced tile: splits `size` into ~equal aligned tiles (minimizes padding)."""
    n_blocks = max(_cdiv(size, block), min_blocks)
    tile = _round_up(_cdiv(size, n_blocks), align)
    if tile >= size:
        return size  # single full-extent block: "equal full dim" satisfies layout rule
    return tile


def cl_similarity(x, y, *, sim_type="cosine", temp=0.05, eps=1e-8,
                  block_m=256, block_n=256, vmem_budget=_VMEM_BUDGET):
    """Pallas TPU Similarity.forward: [Bx,H] x [By,H] -> [Bx,By] f32 logits."""
    if x.ndim != 2 or y.ndim != 2 or x.shape[1] != y.shape[1]:
        raise ValueError(f"expected [Bx,H]/[By,H] inputs, got {x.shape} / {y.shape}")
    if sim_type not in ("cosine", "dot"):
        raise NotImplementedError(
            f"Unsupported similarity function [{sim_type}]. Only cosine and dot are supported."
        )
    Bx, H = x.shape
    By, _ = y.shape
    x_item = jnp.dtype(x.dtype).itemsize
    y_item = jnp.dtype(y.dtype).itemsize
    inv_temp = float(1.0 / temp)
    is_cos = sim_type == "cosine"

    if is_cos:
        # Hoisted norm math: computed once here (plain XLA, tiny outputs) instead of
        # being recomputed for every output tile inside the kernel.
        xf = x.astype(jnp.float32)
        yf = y.astype(jnp.float32)
        x_norm = jnp.sqrt(jnp.sum(xf * xf, axis=-1, keepdims=True))      # [Bx, 1]
        y_norm = jnp.sqrt(jnp.sum(yf * yf, axis=-1, keepdims=True))      # [By, 1]
        # Per-vector eps clamp (vs torch's clamp on the norm product): identical for
        # any non-degenerate embedding.
        inv_x = (inv_temp / jnp.maximum(x_norm, eps)).astype(jnp.float32)           # [Bx, 1]
        inv_y = (1.0 / jnp.maximum(y_norm, eps)).astype(jnp.float32).reshape(1, By)  # [1, By]

    # Balanced, aligned tiles. min_blocks=2 on the row axis keeps both v7x TensorCores
    # busy for small/medium batches (no effect on single-TC v5e/v6e beyond ~0.35us/step).
    tm = _pick_tile(Bx, block_m, 8, min_blocks=2)
    tn = _pick_tile(By, block_n, 128)

    def fp_resident(tm_):
        # Double-buffered footprint with y fully resident.
        return 2 * (tm_ * H * x_item + By * H * y_item + tm_ * By * 4 + tm_ * 4 + By * 4)

    def fp_tiled(tm_, tn_):
        return 2 * (tm_ * H * x_item + tn_ * H * y_item + tm_ * tn_ * 4 + tm_ * 4 + tn_ * 4)

    y_resident = fp_resident(tm) <= vmem_budget
    if y_resident:
        tn = By
        footprint = fp_resident(tm)
    else:
        while fp_tiled(tm, tn) > vmem_budget:
            if tn > 128:
                tn = max(128, _round_up(tn // 2, 128))
            elif tm > 8:
                tm = max(8, _round_up(tm // 2, 8))
            else:
                # TODO(synk): add a K (hidden-dim) grid axis with an f32 VMEM accumulator
                # for extremely large H; full-H blocks are assumed here.
                break
        footprint = fp_tiled(tm, tn)

    grid_i = _cdiv(Bx, tm)
    grid_j = _cdiv(By, tn)

    kernel = _cosine_sim_kernel if is_cos else functools.partial(
        _dot_sim_kernel, inv_temp=inv_temp)

    if y_resident:
        grid = (grid_i,)
        x_spec = pl.BlockSpec((tm, H), lambda i: (i, 0))
        y_spec = pl.BlockSpec((By, H), lambda i: (0, 0))        # fetched once, stays in VMEM
        out_spec = pl.BlockSpec((tm, By), lambda i: (i, 0))
        scale_specs = [pl.BlockSpec((tm, 1), lambda i: (i, 0)),
                       pl.BlockSpec((1, By), lambda i: (0, 0))]
        dims = ("parallel",)
        y_reads = 1
    else:
        grid = (grid_i, grid_j)
        x_spec = pl.BlockSpec((tm, H), lambda i, j: (i, 0))
        y_spec = pl.BlockSpec((tn, H), lambda i, j: (j, 0))
        out_spec = pl.BlockSpec((tm, tn), lambda i, j: (i, j))
        scale_specs = [pl.BlockSpec((tm, 1), lambda i, j: (i, 0)),
                       pl.BlockSpec((1, tn), lambda i, j: (0, j))]
        dims = ("parallel", "parallel")
        y_reads = grid_i if grid_j > 1 else 1                   # y re-streamed once per row tile

    in_specs = [x_spec, y_spec] + (scale_specs if is_cos else [])
    operands = (x, y, inv_x, inv_y) if is_cos else (x, y)

    cost = pl.CostEstimate(
        flops=2 * Bx * By * H,
        transcendentals=0,
        bytes_accessed=(Bx * H * x_item + y_reads * By * H * y_item
                        + Bx * By * 4 + (Bx + By) * 4 * int(is_cos)),
    )
    vmem_limit = int(min(max(footprint + (8 << 20), 16 << 20), 48 << 20))

    return pl.pallas_call(
        kernel,
        out_shape=jax.ShapeDtypeStruct((Bx, By), jnp.float32),
        grid=grid,
        in_specs=in_specs,
        out_specs=out_spec,
        compiler_params=pltpu.CompilerParams(
            dimension_semantics=dims,
            vmem_limit_bytes=vmem_limit,
        ),
        cost_estimate=cost,
    )(*operands)


if __name__ == "__main__":
    key = jax.random.PRNGKey(0)
    kx, ky, kz, kw = jax.random.split(key, 4)
    B, H = 8, 32
    temp = 0.05
    eps = 1e-8

    x = jax.random.normal(kx, (B, H), dtype=jnp.float32)
    y = jax.random.normal(ky, (B, H), dtype=jnp.float32)

    def ref_cos(a, b):  # torch.nn.CosineSimilarity semantics
        num = a @ b.T
        den = jnp.maximum(
            jnp.linalg.norm(a, axis=-1, keepdims=True)
            * jnp.linalg.norm(b, axis=-1, keepdims=True).T,
            eps,
        )
        return num / den / temp

    # --- cosine mode (SimCSE default; y-resident 1-D grid path) ---
    out_cos = cl_similarity(x, y, sim_type="cosine", temp=temp)
    jax.block_until_ready(out_cos)

    # --- dot mode ---
    out_dot = cl_similarity(x, y, sim_type="dot", temp=temp)
    jax.block_until_ready(out_dot)

    # --- non-square, non-aligned By (no-padding / masked-store path) ---
    y2 = jax.random.normal(kz, (10, H), dtype=jnp.float32)
    out_ns = cl_similarity(x, y2, sim_type="cosine", temp=temp)
    jax.block_until_ready(out_ns)

    # --- bf16 inputs (native-dtype MXU path, f32 scales) ---
    out_bf = cl_similarity(x.astype(jnp.bfloat16), y.astype(jnp.bfloat16),
                           sim_type="cosine", temp=temp)
    jax.block_until_ready(out_bf)

    # --- force the 2-D tiled grid with partial boundary blocks (coverage of the
    #     non-resident path on larger shapes) ---
    x3 = jax.random.normal(kw, (20, 64), dtype=jnp.float32)
    y3 = jax.random.normal(kz, (300, 64), dtype=jnp.float32)
    out_2d = cl_similarity(x3, y3, sim_type="cosine", temp=temp,
                           block_n=128, vmem_budget=0)
    jax.block_until_ready(out_2d)

    assert out_cos.shape == (B, B) and out_dot.shape == (B, B)
    assert out_ns.shape == (B, 10) and out_2d.shape == (20, 300)
    assert jnp.allclose(out_cos, ref_cos(x, y), atol=1e-4, rtol=1e-4)
    assert jnp.allclose(out_dot, (x @ y.T) / temp, atol=1e-4, rtol=1e-4)
    assert jnp.allclose(out_ns, ref_cos(x, y2), atol=1e-4, rtol=1e-4)
    assert jnp.allclose(out_bf, ref_cos(x, y), atol=5e-2, rtol=5e-2)
    assert jnp.allclose(out_2d, ref_cos(x3, y3), atol=1e-3, rtol=1e-3)

    print("KERNEL_OK")
</pallas_src>

<mosaic_0001>
module attributes {stable_mosaic.version = 11 : i64} {
  func.func @_cosine_sim_kernel(%arg0: i32, %arg1: memref<8x32xf32, #tpu.memory_space<vmem>>, %arg2: memref<8x32xf32, #tpu.memory_space<vmem>>, %arg3: memref<8x1xf32, #tpu.memory_space<vmem>>, %arg4: memref<1x8xf32, #tpu.memory_space<vmem>>, %arg5: memref<8x8xf32, #tpu.memory_space<vmem>>) attributes {dimension_semantics = [#tpu.dimension_semantics<parallel>], iteration_bounds = array<i64: 1>, scalar_prefetch = 0 : i64, scratch_operands = 0 : i64, tpu.core_type = #tpu.core_type<tc>, window_params = [{transform_indices = @transform_0, window_bounds = array<i64: 8, 32>}, {pipeline_mode = #tpu.pipeline_mode<synchronous>, transform_indices = @transform_1, window_bounds = array<i64: 8, 32>}, {transform_indices = @transform_2, window_bounds = array<i64: 8, 1>}, {pipeline_mode = #tpu.pipeline_mode<synchronous>, transform_indices = @transform_3, window_bounds = array<i64: 1, 8>}, {transform_indices = @transform_4, window_bounds = array<i64: 8, 8>}]} {
    %c0 = arith.constant 0 : index
    %c0_0 = arith.constant 0 : index
    %0 = vector.load %arg1[%c0, %c0_0] : memref<8x32xf32, #tpu.memory_space<vmem>>, vector<8x32xf32>
    %c0_1 = arith.constant 0 : index
    %c0_2 = arith.constant 0 : index
    %1 = vector.load %arg2[%c0_1, %c0_2] : memref<8x32xf32, #tpu.memory_space<vmem>>, vector<8x32xf32>
    %cst = arith.constant dense<0.000000e+00> : vector<8x8xf32>
    %2 = tpu.matmul %0, %1, %cst {dimension_numbers = #tpu.dot_dimension_numbers<[1], [1], [0], [0], [0, 0, 1, 0], [], []>} : vector<8x32xf32>, vector<8x32xf32>, vector<8x8xf32> -> vector<8x8xf32>
    %c0_3 = arith.constant 0 : index
    %c0_4 = arith.constant 0 : index
    %3 = vector.load %arg3[%c0_3, %c0_4] : memref<8x1xf32, #tpu.memory_space<vmem>>, vector<8x1xf32>
    %4 = vector.broadcast %3 : vector<8x1xf32> to vector<8x8xf32>
    %5 = arith.mulf %2, %4 : vector<8x8xf32>
    %c0_5 = arith.constant 0 : index
    %c0_6 = arith.constant 0 : index
    %6 = vector.load %arg4[%c0_5, %c0_6] : memref<1x8xf32, #tpu.memory_space<vmem>>, vector<1x8xf32>
    %7 = vector.broadcast %6 : vector<1x8xf32> to vector<8x8xf32>
    %8 = arith.mulf %5, %7 : vector<8x8xf32>
    %c0_7 = arith.constant 0 : index
    %c0_8 = arith.constant 0 : index
    %9 = vector.load %arg5[%c0_7, %c0_8] : memref<8x8xf32, #tpu.memory_space<vmem>>, vector<8x8xf32>
    tpu.vector_store %arg5[%c0_7, %c0_8], %8 {strides = array<i32>} : memref<8x8xf32, #tpu.memory_space<vmem>>, vector<8x8xf32>,
    return
  }
  func.func @transform_0(%arg0: i32) -> (i32, i32) {
    %c0_i32 = arith.constant 0 : i32
    %c0_i32_0 = arith.constant 0 : i32
    return %arg0, %c0_i32 : i32, i32
  }
  func.func @transform_1(%arg0: i32) -> (i32, i32) {
    %c0_i32 = arith.constant 0 : i32
    %c0_i32_0 = arith.constant 0 : i32
    %c0_i32_1 = arith.constant 0 : i32
    return %c0_i32, %c0_i32_0 : i32, i32
  }
  func.func @transform_2(%arg0: i32) -> (i32, i32) {
    %c0_i32 = arith.constant 0 : i32
    %c0_i32_0 = arith.constant 0 : i32
    return %arg0, %c0_i32 : i32, i32
  }
  func.func @transform_3(%arg0: i32) -> (i32, i32) {
    %c0_i32 = arith.constant 0 : i32
    %c0_i32_0 = arith.constant 0 : i32
    %c0_i32_1 = arith.constant 0 : i32
    return %c0_i32, %c0_i32_0 : i32, i32
  }
  func.func @transform_4(%arg0: i32) -> (i32, i32) {
    %c0_i32 = arith.constant 0 : i32
    %c0_i32_0 = arith.constant 0 : i32
    return %arg0, %c0_i32 : i32, i32
  }
}

</mosaic_0001>

<llo_original>
// kernel: tpu_custom_call.1
$region0: #{tpu_custom_call.1}
  #allocation0 [shape = 'u32[]', space=smem, size = 0x4, offset = 0x4, fixed_abs, tag = 'smem constant byte address 0x4 - core index']
  #allocation1 [shape = 'u32[144,128]{1,0:T(1,128)}', space=vmem, size = 0x12000, scoped, tag = 'internal scratch']
  %s0 = inlined_call_operand.vmem [shape: f32[8,32], index: 0, kind: input, shape index: {}]
  %s1 = inlined_call_operand.hbm [shape: f32[8,32], index: 1, kind: input, shape index: {}]
  %s2 = inlined_call_operand.vmem [shape: f32[8,1], index: 2, kind: input, shape index: {}]
  %s3 = inlined_call_operand.vmem [shape: f32[1,8], index: 3, kind: input, shape index: {}]
  %s4 = inlined_call_operand.hbm [shape: f32[8,8], index: 4, kind: output, shape index: {}]
  %s5 = sld [smem:[#allocation0]]
  $region30: #{tpu_custom_call.1} parent=0
    _
  %s7 = ssub.s32 1, %s5
  %s8 = scalar_select 0, %s7, %s5
  $region1: #{tpu_custom_call.1} parent=0
    #allocation2 [shape = 'u8[4096]{0}', space=vmem, size = 0x1000, scoped, tag = 'input window, operand 1, single buffered']
    #allocation3 [shape = 's32[1]{0}', space=sflag, size = 0x4, scoped, tag = 'scoped memory for tpu_custom_call.1']
    #allocation4 [shape = 's32[1]{0}', space=sflag, size = 0x4, scoped, tag = 'scoped memory for tpu_custom_call.1']
    #allocation5 [shape = 'u8[4096]{0}', space=vmem, size = 0x1000, scoped, tag = 'output window, operand 0, single buffered']
    %9 = vsyncpa [#allocation3], 0
    %10 = vsyncpa [#allocation4], 0
    // Predicated region
    $region2: #{tpu_custom_call.1} parent=1 // pred_check
      _
    $region3: #{tpu_custom_call.1} parent=1 // pred_check_branch
      %12 = sbr.rel (0) target = $region5
    $region4: #{tpu_custom_call.1} parent=1 // pred_region
      _
    $region5: #{tpu_custom_call.1} parent=1 // pred_fallthru
      _
    // Predicated region
    $region6: #{tpu_custom_call.1} parent=1 // pred_check
      _
    $region7: #{tpu_custom_call.1} parent=1 // pred_check_branch
      %14 = sbr.rel (0) target = $region9
    $region8: #{tpu_custom_call.1} parent=1 // pred_region
      %s16 = ssub.s32 128, 128
      %17 = vsyncadd [#allocation3], %s16
      %s19 = sshll.u32 [#allocation2], 4
      %s20 = int_to_ptr.vmem [resolvable:$true] %s19
      %22 = dma.hbm_to_vmem [thread:$0]  %s1, 128, %s20, [#allocation3]
    $region9: #{tpu_custom_call.1} parent=1 // pred_fallthru
      _
    // Predicated region
    $region10: #{tpu_custom_call.1} parent=1 // pred_check
      _
    $region11: #{tpu_custom_call.1} parent=1 // pred_check_branch
      %24 = sbr.rel (0) target = $region13
    $region12: #{tpu_custom_call.1} parent=1 // pred_region
      _
    $region13: #{tpu_custom_call.1} parent=1 // pred_fallthru
      _
    // Predicated region
    $region14: #{tpu_custom_call.1} parent=1 // pred_check
      _
    $region15: #{tpu_custom_call.1} parent=1 // pred_check_branch
      %26 = sbr.rel (0) target = $region17
    $region16: #{tpu_custom_call.1} parent=1 // pred_region
      _
    $region17: #{tpu_custom_call.1} parent=1 // pred_fallthru
      _
    // Predicated region
    $region18: #{tpu_custom_call.1} parent=1 // pred_check
      _
    $region19: #{tpu_custom_call.1} parent=1 // pred_check_branch
      %28 = sbr.rel (0) target = $region21
    $region20: #{tpu_custom_call.1} parent=1 // pred_region
      %29 = dma.done [#allocation3], 128
    $region21: #{tpu_custom_call.1} parent=1 // pred_fallthru
      _
    %v30 = vld [vmem:[%s0] sm:$0xff]
    %v31 = vld [vmem:[#allocation2] sm:$0xff]
    %vm32 = vcmask 261120
    %v34 = vsel %vm32, %v30, 0
    %v37 = vsel %vm32, %v31, 0
    %39 = vmatprep.subr.mxu0 0.0
    %40 = vmatpush1.xpose.msra.mxu0 %v37
    %41 = vmatprep.subr.mxu0 0.0
    %42 = vmatpush1.xpose.msra.mxu0 0.0
    %43 = vmatprep.subr.mxu0 0.0
    %44 = vmatpush1.xpose.msra.mxu0 0.0
    %45 = vmatprep.subr.mxu0 0.0
    %46 = vmatpush1.xpose.msra.mxu0 0.0
    %47 = vmatprep.subr.mxu0 0.0
    %48 = vmatpush1.xpose.msra.mxu0 0.0
    %49 = vmatprep.subr.mxu0 0.0
    %50 = vmatpush1.xpose.msra.mxu0 0.0
    %51 = vmatprep.subr.mxu0 0.0
    %52 = vmatpush1.xpose.msra.mxu0 0.0
    %53 = vmatprep.subr.mxu0 0.0
    %54 = vmatpush1.xpose.msra.mxu0 0.0
    %55 = vmatprep.subr.mxu0 0.0
    %56 = vmatpush1.xpose.msra.mxu0 0.0
    %57 = vmatprep.subr.mxu0 0.0
    %58 = vmatpush1.xpose.msra.mxu0 0.0
    %59 = vmatprep.subr.mxu0 0.0
    %60 = vmatpush1.xpose.msra.mxu0 0.0
    %61 = vmatprep.subr.mxu0 0.0
    %62 = vmatpush1.xpose.msra.mxu0 0.0
    %63 = vmatprep.subr.mxu0 0.0
    %64 = vmatpush1.xpose.msra.mxu0 0.0
    %65 = vmatprep.subr.mxu0 0.0
    %66 = vmatpush1.xpose.msra.mxu0 0.0
    %67 = vmatprep.subr.mxu0 0.0
    %68 = vmatpush1.xpose.msra.mxu0 0.0
    %69 = vmatprep.subr.mxu0 0.0
    %70 = vmatpush1.xpose.msra.mxu0 0.0
    %71 = vmatprep.subr.mxu0 0.0
    %72 = vmatpush1.xpose.msra.mxu0 0.0
    %73 = vmatprep.subr.mxu0 0.0
    %74 = vmatpush1.xpose.msra.mxu0 0.0
    %75 = vmatprep.subr.mxu0 0.0
    %76 = vmatpush1.xpose.msra.mxu0 0.0
    %77 = vmatprep.subr.mxu0 0.0
    %78 = vmatpush1.xpose.msra.mxu0 0.0
    %79 = vmatprep.subr.mxu0 0.0
    %80 = vmatpush1.xpose.msra.mxu0 0.0
    %81 = vmatprep.subr.mxu0 0.0
    %82 = vmatpush1.xpose.msra.mxu0 0.0
    %83 = vmatprep.subr.mxu0 0.0
    %84 = vmatpush1.xpose.msra.mxu0 0.0
    %85 = vmatprep.subr.mxu0 0.0
    %86 = vmatpush1.xpose.msra.mxu0 0.0
    %87 = vmatprep.subr.mxu0 0.0
    %88 = vmatpush1.xpose.msra.mxu0 0.0
    %89 = vmatprep.subr.mxu0 0.0
    %90 = vmatpush1.xpose.msra.mxu0 0.0
    %91 = vmatprep.subr.mxu0 0.0
    %92 = vmatpush1.xpose.msra.mxu0 0.0
    %93 = vmatprep.subr.mxu0 0.0
    %94 = vmatpush1.xpose.msra.mxu0 0.0
    %95 = vmatprep.subr.mxu0 0.0
    %96 = vmatpush1.xpose.msra.mxu0 0.0
    %97 = vmatprep.subr.mxu0 0.0
    %98 = vmatpush1.xpose.msra.mxu0 0.0
    %99 = vmatprep.subr.mxu0 0.0
    %100 = vmatpush1.xpose.msra.mxu0 0.0
    %101 = vmatprep.subr.mxu0 0.0
    %102 = vmatpush1.xpose.msra.mxu0 0.0
    %103 = vmatprep.mubr.f32.mxu0 0.0
    %104 = vmatmul.mubr.f32.gmra.mrb[0].mxu0 %v34
    %v105 = vpop.f32.mrb[0].mxu0
    %v106 = vadd.f32 0.0, %v105
    %v107 = vpop.f32.mrb[0].mxu0
    %108 = vdwg.mxu0
    %v109 = vld [vmem:[%s2] sm:$0xff]
    %111 = vset.pattern.permute.xlu0 0
    %112 = vperm.xlu0 %111, %v109
    %v113 = vpop.permute.xlu0 %112
    %v115 = vmul.f32 %v106, %v113
    %v116 = vld [vmem:[%s3] sm:$0x1]
    %v118 = vlaneseq
    %v119 = vshrl.u32 %v118, 7
    %v120 = vsub.s32 0, %v119
    %v121 = vrot.slane %v116, %v120
    %v123 = vmul.f32 %v115, %v121
    %vm124 = vcmask 64512
    %125 = vst.msk [vmem:[#allocation5] sm:$0xff] %vm124, %v123
    // Predicated region
    $region22: #{tpu_custom_call.1} parent=1 // pred_check
      _
    $region23: #{tpu_custom_call.1} parent=1 // pred_check_branch
      %127 = sbr.rel (0) target = $region25
    $region24: #{tpu_custom_call.1} parent=1 // pred_region
      %s129 = ssub.s32 128, 128
      %130 = vsyncadd [#allocation4], %s129
      %s132 = sshll.u32 [#allocation5], 4
      %s133 = int_to_ptr.vmem [resolvable:$true] %s132
      %135 = dma.vmem_to_hbm [thread:$0]  %s133, 128, %s4, [#allocation4]
    $region25: #{tpu_custom_call.1} parent=1 // pred_fallthru
      _
    // Predicated region
    $region26: #{tpu_custom_call.1} parent=1 // pred_check
      _
    $region27: #{tpu_custom_call.1} parent=1 // pred_check_branch
      %137 = sbr.rel (0) target = $region29
    $region28: #{tpu_custom_call.1} parent=1 // pred_region
      %138 = dma.done [#allocation4], 128
    $region29: #{tpu_custom_call.1} parent=1 // pred_fallthru
      _
    %139 = vsyncpa [#allocation3], 1
    %140 = vsyncpa [#allocation4], 1

</llo_original>
